<compile_context>
chip_gen: v6e
topology: v6e:2x2x1
jax: 0.10.0
libtpu: 0.0.40
codegen_flags: <defaults>
</compile_context>

<pallas_src>
import functools
import math

import jax
import jax.numpy as jnp
from jax.experimental import pallas as pl
from jax.experimental.pallas import tpu as pltpu


def _round_up(x, m):
    return ((x + m - 1) // m) * m


def gmm_kernel(x_ref, wh_ref, bh_ref, w_head_ref, b_head_ref, out_ref,
               *, sigma_start, sigma_end):
    # Hidden layer: bf16 MXU matmul, f32 accumulation, f32 bias + tanh (EUP).
    h = jnp.tanh(
        jnp.dot(x_ref[...], wh_ref[...], preferred_element_type=jnp.float32)
        + bh_ref[...]
    )
    # Fused heads [lambd | mu | sigma | pad]: single lane-dense matmul.
    y = (
        jnp.dot(h.astype(jnp.bfloat16), w_head_ref[...],
                preferred_element_type=jnp.float32)
        + b_head_ref[...]
    )
    # Fuse exp() for the sigma columns in-kernel (EUP slot; hidden under MXU).
    col = jax.lax.broadcasted_iota(jnp.int32, y.shape, 1)
    is_sigma = (col >= sigma_start) & (col < sigma_end)
    out_ref[...] = jnp.where(is_sigma, jnp.exp(y), y)


@functools.partial(jax.jit, static_argnames=("M", "z_dim"))
def gmm_forward(x, params, *, M, z_dim):
    wh, bh, wl, bl, wmu, bmu, ws, bs = params
    B, K = x.shape
    emb = wh.shape[1]

    # --- Fuse the three heads along the output axis: [lambd | mu | sigma]. ---
    w_head = jnp.concatenate([wl, wmu, ws], axis=1)        # (emb, 2M + M*z)
    b_head = jnp.concatenate([bl, bmu, bs], axis=1)        # (1,   2M + M*z)
    n_head = 2 * M + M * z_dim
    sigma_start = M + M * z_dim
    sigma_end = n_head

    # --- Pad emb and the fused head width to lane multiples (128). ---
    EMB_PAD = _round_up(emb, 128)
    N_PAD = _round_up(n_head, 128)
    wh_p = jnp.pad(wh, ((0, 0), (0, EMB_PAD - emb)))
    bh_p = jnp.pad(bh, ((0, 0), (0, EMB_PAD - emb)))
    w_head_p = jnp.pad(w_head, ((0, EMB_PAD - emb), (0, N_PAD - n_head)))
    b_head_p = jnp.pad(b_head, ((0, 0), (0, N_PAD - n_head)))

    # --- Batch tiling: MXU-aligned tile, padded rows sliced off afterwards. ---
    TB = min(512, _round_up(B, 8))
    B_PAD = _round_up(B, TB)
    x_p = jnp.pad(x, ((0, B_PAD - B), (0, 0)))

    # bf16 matmul inputs, f32 biases / accumulation / activations.
    x_bf = x_p.astype(jnp.bfloat16)
    wh_bf = wh_p.astype(jnp.bfloat16)
    w_head_bf = w_head_p.astype(jnp.bfloat16)

    grid = (B_PAD // TB,)
    cost = pl.CostEstimate(
        flops=2 * B_PAD * (K * EMB_PAD + EMB_PAD * N_PAD),
        transcendentals=B_PAD * (EMB_PAD + N_PAD),
        bytes_accessed=(x_bf.size * 2 + wh_bf.size * 2 + w_head_bf.size * 2
                        + bh_p.size * 4 + b_head_p.size * 4
                        + B_PAD * N_PAD * 4),
    )

    kernel = functools.partial(
        gmm_kernel, sigma_start=sigma_start, sigma_end=sigma_end)

    out = pl.pallas_call(
        kernel,
        out_shape=jax.ShapeDtypeStruct((B_PAD, N_PAD), jnp.float32),
        grid=grid,
        in_specs=[
            pl.BlockSpec((TB, K), lambda i: (i, 0)),           # x: pipelined
            pl.BlockSpec((K, EMB_PAD), lambda i: (0, 0)),      # Wh: resident
            pl.BlockSpec((1, EMB_PAD), lambda i: (0, 0)),      # bh: resident
            pl.BlockSpec((EMB_PAD, N_PAD), lambda i: (0, 0)),  # W_head: resident
            pl.BlockSpec((1, N_PAD), lambda i: (0, 0)),        # b_head: resident
        ],
        out_specs=pl.BlockSpec((TB, N_PAD), lambda i: (i, 0)),
        compiler_params=pltpu.CompilerParams(
            dimension_semantics=("parallel",),
        ),
        cost_estimate=cost,
    )(x_bf, wh_bf, bh_p, w_head_bf, b_head_p)

    # --- Split fused output (exp already applied to sigma in-kernel). ---
    out = out[:B]
    lambd = out[:, :M]
    mu = out[:, M:M + M * z_dim].reshape(B, M, z_dim)
    sigma = out[:, sigma_start:sigma_end]
    return lambd, mu, sigma


def init_linear(key, in_features, out_features):
    """Deterministic init mimicking torch.nn.Linear (uniform +-1/sqrt(in)).

    Weight is returned already transposed to (in_features, out_features) and
    bias as a (1, out_features) row for in-kernel broadcasting.
    """
    kw, kb = jax.random.split(key)
    bound = 1.0 / math.sqrt(in_features)
    w = jax.random.uniform(kw, (in_features, out_features), jnp.float32,
                           minval=-bound, maxval=bound)
    b = jax.random.uniform(kb, (1, out_features), jnp.float32,
                           minval=-bound, maxval=bound)
    return w, b


def reference_forward(x, params, M, z_dim):
    wh, bh, wl, bl, wmu, bmu, ws, bs = params
    h = jnp.tanh(x @ wh + bh)
    lambd = h @ wl + bl
    mu = (h @ wmu + bmu).reshape(-1, M, z_dim)
    sigma = jnp.exp(h @ ws + bs)
    return lambd, mu, sigma


if __name__ == "__main__":
    # Small shapes consistent with the module's constructor args.
    B = 8
    z_dim = 32
    gmm_emb_dim = 64
    M = 4

    key = jax.random.PRNGKey(0)
    kx, kh, kl, kmu, ks = jax.random.split(key, 5)

    x = jax.random.normal(kx, (B, z_dim), jnp.float32)

    wh, bh = init_linear(kh, z_dim, gmm_emb_dim)
    wl, bl = init_linear(kl, gmm_emb_dim, M)
    wmu, bmu = init_linear(kmu, gmm_emb_dim, M * z_dim)
    ws, bs = init_linear(ks, gmm_emb_dim, M)
    params = (wh, bh, wl, bl, wmu, bmu, ws, bs)

    lambd, mu, sigma = gmm_forward(x, params, M=M, z_dim=z_dim)
    jax.block_until_ready((lambd, mu, sigma))

    # Sanity check against a pure-JAX f32 reference (kernel computes the
    # matmuls in bf16 with f32 accumulation, hence the relaxed tolerance).
    ref_lambd, ref_mu, ref_sigma = reference_forward(x, params, M, z_dim)
    assert lambd.shape == (B, M)
    assert mu.shape == (B, M, z_dim)
    assert sigma.shape == (B, M)
    assert jnp.allclose(lambd, ref_lambd, atol=5e-2, rtol=5e-2)
    assert jnp.allclose(mu, ref_mu, atol=5e-2, rtol=5e-2)
    assert jnp.allclose(sigma, ref_sigma, atol=5e-2, rtol=5e-2)

    print("KERNEL_OK")
</pallas_src>

<mosaic_0001>
module attributes {stable_mosaic.version = 11 : i64} {
  func.func @gmm_kernel(%arg0: i32, %arg1: memref<8x32xbf16, #tpu.memory_space<vmem>>, %arg2: memref<32x128xbf16, #tpu.memory_space<vmem>>, %arg3: memref<1x128xf32, #tpu.memory_space<vmem>>, %arg4: memref<128x256xbf16, #tpu.memory_space<vmem>>, %arg5: memref<1x256xf32, #tpu.memory_space<vmem>>, %arg6: memref<8x256xf32, #tpu.memory_space<vmem>>) attributes {dimension_semantics = [#tpu.dimension_semantics<parallel>], iteration_bounds = array<i64: 1>, scalar_prefetch = 0 : i64, scratch_operands = 0 : i64, tpu.core_type = #tpu.core_type<tc>, window_params = [{transform_indices = @transform_0, window_bounds = array<i64: 8, 32>}, {pipeline_mode = #tpu.pipeline_mode<synchronous>, transform_indices = @transform_1, window_bounds = array<i64: 32, 128>}, {pipeline_mode = #tpu.pipeline_mode<synchronous>, transform_indices = @transform_2, window_bounds = array<i64: 1, 128>}, {pipeline_mode = #tpu.pipeline_mode<synchronous>, transform_indices = @transform_3, window_bounds = array<i64: 128, 256>}, {pipeline_mode = #tpu.pipeline_mode<synchronous>, transform_indices = @transform_4, window_bounds = array<i64: 1, 256>}, {transform_indices = @transform_5, window_bounds = array<i64: 8, 256>}]} {
    %c0 = arith.constant 0 : index
    %c0_0 = arith.constant 0 : index
    %0 = vector.load %arg1[%c0, %c0_0] : memref<8x32xbf16, #tpu.memory_space<vmem>>, vector<8x32xbf16>
    %c0_1 = arith.constant 0 : index
    %c0_2 = arith.constant 0 : index
    %1 = vector.load %arg2[%c0_1, %c0_2] : memref<32x128xbf16, #tpu.memory_space<vmem>>, vector<32x128xbf16>
    %cst = arith.constant dense<0.000000e+00> : vector<8x128xf32>
    %2 = tpu.matmul %0, %1, %cst {dimension_numbers = #tpu.dot_dimension_numbers<[1], [0], [0], [1], [0, 0, 1, 1], [], []>} : vector<8x32xbf16>, vector<32x128xbf16>, vector<8x128xf32> -> vector<8x128xf32>
    %c0_3 = arith.constant 0 : index
    %c0_4 = arith.constant 0 : index
    %3 = vector.load %arg3[%c0_3, %c0_4] : memref<1x128xf32, #tpu.memory_space<vmem>>, vector<1x128xf32>
    %4 = vector.broadcast %3 : vector<1x128xf32> to vector<8x128xf32>
    %5 = arith.addf %2, %4 : vector<8x128xf32>
    %6 = math.tanh %5 : vector<8x128xf32>
    %7 = arith.truncf %6 : vector<8x128xf32> to vector<8x128xbf16>
    %c0_5 = arith.constant 0 : index
    %c0_6 = arith.constant 0 : index
    %8 = vector.load %arg4[%c0_5, %c0_6] : memref<128x256xbf16, #tpu.memory_space<vmem>>, vector<128x256xbf16>
    %cst_7 = arith.constant dense<0.000000e+00> : vector<8x256xf32>
    %9 = tpu.matmul %7, %8, %cst_7 {dimension_numbers = #tpu.dot_dimension_numbers<[1], [0], [0], [1], [0, 0, 1, 1], [], []>} : vector<8x128xbf16>, vector<128x256xbf16>, vector<8x256xf32> -> vector<8x256xf32>
    %c0_8 = arith.constant 0 : index
    %c0_9 = arith.constant 0 : index
    %10 = vector.load %arg5[%c0_8, %c0_9] : memref<1x256xf32, #tpu.memory_space<vmem>>, vector<1x256xf32>
    %11 = vector.broadcast %10 : vector<1x256xf32> to vector<8x256xf32>
    %12 = arith.addf %9, %11 : vector<8x256xf32>
    %13 = tpu.iota {dimensions = array<i32: 1>} : vector<8x256xi32>
    %c132_i32 = arith.constant 132 : i32
    %14 = vector.broadcast %c132_i32 : i32 to vector<8x256xi32>
    %15 = arith.cmpi sge, %13, %14 : vector<8x256xi32>
    %c136_i32 = arith.constant 136 : i32
    %16 = vector.broadcast %c136_i32 : i32 to vector<8x256xi32>
    %17 = arith.cmpi slt, %13, %16 : vector<8x256xi32>
    %18 = arith.andi %15, %17 : vector<8x256xi1>
    %19 = math.exp %12 : vector<8x256xf32>
    %20 = arith.select %18, %19, %12 : vector<8x256xi1>, vector<8x256xf32>
    %c0_10 = arith.constant 0 : index
    %c0_11 = arith.constant 0 : index
    %21 = vector.load %arg6[%c0_10, %c0_11] : memref<8x256xf32, #tpu.memory_space<vmem>>, vector<8x256xf32>
    tpu.vector_store %arg6[%c0_10, %c0_11], %20 {strides = array<i32>} : memref<8x256xf32, #tpu.memory_space<vmem>>, vector<8x256xf32>,
    return
  }
  func.func @transform_0(%arg0: i32) -> (i32, i32) {
    %c0_i32 = arith.constant 0 : i32
    %c0_i32_0 = arith.constant 0 : i32
    return %arg0, %c0_i32 : i32, i32
  }
  func.func @transform_1(%arg0: i32) -> (i32, i32) {
    %c0_i32 = arith.constant 0 : i32
    %c0_i32_0 = arith.constant 0 : i32
    %c0_i32_1 = arith.constant 0 : i32
    return %c0_i32, %c0_i32_0 : i32, i32
  }
  func.func @transform_2(%arg0: i32) -> (i32, i32) {
    %c0_i32 = arith.constant 0 : i32
    %c0_i32_0 = arith.constant 0 : i32
    %c0_i32_1 = arith.constant 0 : i32
    return %c0_i32, %c0_i32_0 : i32, i32
  }
  func.func @transform_3(%arg0: i32) -> (i32, i32) {
    %c0_i32 = arith.constant 0 : i32
    %c0_i32_0 = arith.constant 0 : i32
    %c0_i32_1 = arith.constant 0 : i32
    return %c0_i32, %c0_i32_0 : i32, i32
  }
  func.func @transform_4(%arg0: i32) -> (i32, i32) {
    %c0_i32 = arith.constant 0 : i32
    %c0_i32_0 = arith.constant 0 : i32
    %c0_i32_1 = arith.constant 0 : i32
    return %c0_i32, %c0_i32_0 : i32, i32
  }
  func.func @transform_5(%arg0: i32) -> (i32, i32) {
    %c0_i32 = arith.constant 0 : i32
    %c0_i32_0 = arith.constant 0 : i32
    return %arg0, %c0_i32 : i32, i32
  }
}

</mosaic_0001>

<llo_original>
// kernel: gmm_forward.1
$region0: #{gmm_forward.1}
  #allocation0 [shape = 'u32[]', space=smem, size = 0x4, offset = 0x4, fixed_abs, tag = 'smem constant byte address 0x4 - core index']
  #allocation1 [shape = 'u32[144,128]{1,0:T(1,128)}', space=vmem, size = 0x12000, scoped, tag = 'internal scratch']
  %s0 = inlined_call_operand.vmem [shape: bf16[8,32], index: 0, kind: input, shape index: {}]
  %s1 = inlined_call_operand.vmem [shape: bf16[32,128], index: 1, kind: input, shape index: {}]
  %s2 = inlined_call_operand.vmem [shape: f32[1,128], index: 2, kind: input, shape index: {}]
  %s3 = inlined_call_operand.vmem [shape: bf16[128,256], index: 3, kind: input, shape index: {}]
  %s4 = inlined_call_operand.vmem [shape: f32[1,256], index: 4, kind: input, shape index: {}]
  %s5 = inlined_call_operand.vmem [shape: f32[8,256], index: 5, kind: output, shape index: {}]
  %s6 = sld [smem:[#allocation0]]
  $region30: #{gmm_forward.1} parent=0
    _
  %s8 = ssub.s32 1, %s6
  %s9 = scalar_select 0, %s8, %s6
  // Predicated region
  $region2: #{gmm_forward.1} parent=0 // pred_check
    _
  $region3: #{gmm_forward.1} parent=0 // pred_check_branch
    %11 = sbr.rel (0) target = $region5
  $region4: #{gmm_forward.1} parent=0 // pred_region
    _
  $region5: #{gmm_forward.1} parent=0 // pred_fallthru
    _
  // Predicated region
  $region6: #{gmm_forward.1} parent=0 // pred_check
    _
  $region7: #{gmm_forward.1} parent=0 // pred_check_branch
    %13 = sbr.rel (0) target = $region9
  $region8: #{gmm_forward.1} parent=0 // pred_region
    _
  $region9: #{gmm_forward.1} parent=0 // pred_fallthru
    _
  // Predicated region
  $region10: #{gmm_forward.1} parent=0 // pred_check
    _
  $region11: #{gmm_forward.1} parent=0 // pred_check_branch
    %15 = sbr.rel (0) target = $region13
  $region12: #{gmm_forward.1} parent=0 // pred_region
    _
  $region13: #{gmm_forward.1} parent=0 // pred_fallthru
    _
  // Predicated region
  $region14: #{gmm_forward.1} parent=0 // pred_check
    _
  $region15: #{gmm_forward.1} parent=0 // pred_check_branch
    %17 = sbr.rel (0) target = $region17
  $region16: #{gmm_forward.1} parent=0 // pred_region
    _
  $region17: #{gmm_forward.1} parent=0 // pred_fallthru
    _
  // Predicated region
  $region18: #{gmm_forward.1} parent=0 // pred_check
    _
  $region19: #{gmm_forward.1} parent=0 // pred_check_branch
    %19 = sbr.rel (0) target = $region21
  $region20: #{gmm_forward.1} parent=0 // pred_region
    _
  $region21: #{gmm_forward.1} parent=0 // pred_fallthru
    _
  %v21 = vld [vmem:[%s0] sm:$0xf]
  %v22 = vld [vmem:[%s1] sm:$0xf]
  %v23 = vld [vmem:[%s1 + $0x4] sm:$0xf]
  %v24 = vld [vmem:[%s1 + $0x8] sm:$0xf]
  %v25 = vld [vmem:[%s1 + $0xc] sm:$0xf]
  %v26 = vld [vmem:[%s2] sm:$0x1]
  %v28 = vlaneseq
  %v29 = vshrl.u32 %v28, 7
  %v30 = vsub.s32 0, %v29
  %v31 = vrot.slane %v26, %v30
  %v37 = vunpack.c.l.b16 %v22
  %v38 = vunpack.c.l.b16 %v23
  %v39 = vunpack.c.l.b16 %v24
  %v40 = vunpack.c.l.b16 %v25
  %v41 = vpack.c.b16 %v38, %v37
  %v42 = vpack.c.b16 %v40, %v39
  %vm45 = vcmask 261120
  %v47 = vsel %vm45, %v21, 0
  %49 = vmatprep.subr.bf16.mxu0 0
  %50 = vmatpush1.bf16.msra.mxu0 0
  %51 = vmatprep.subr.bf16.mxu0 0
  %52 = vmatpush1.bf16.msra.mxu0 0
  %53 = vmatprep.subr.bf16.mxu0 0
  %54 = vmatpush1.bf16.msra.mxu0 0
  %55 = vmatprep.subr.bf16.mxu0 0
  %56 = vmatpush1.bf16.msra.mxu0 0
  %57 = vmatprep.subr.bf16.mxu0 0
  %58 = vmatpush1.bf16.msra.mxu0 0
  %59 = vmatprep.subr.bf16.mxu0 0
  %60 = vmatpush1.bf16.msra.mxu0 0
  %61 = vmatprep.subr.bf16.mxu0 0
  %62 = vmatpush1.bf16.msra.mxu0 %v42
  %63 = vmatprep.subr.bf16.mxu0 0
  %64 = vmatpush1.bf16.msra.mxu0 %v41
  %65 = vmatprep.subr.bf16.mxu0 0
  %66 = vmatpush2.bf16.msra.mxu0 0
  %67 = vmatprep.subr.bf16.mxu0 0
  %68 = vmatpush2.bf16.msra.mxu0 0
  %69 = vmatprep.subr.bf16.mxu0 0
  %70 = vmatpush2.bf16.msra.mxu0 0
  %71 = vmatprep.subr.bf16.mxu0 0
  %72 = vmatpush2.bf16.msra.mxu0 0
  %73 = vmatprep.subr.bf16.mxu0 0
  %74 = vmatpush2.bf16.msra.mxu0 0
  %75 = vmatprep.subr.bf16.mxu0 0
  %76 = vmatpush2.bf16.msra.mxu0 0
  %77 = vmatprep.subr.bf16.mxu0 0
  %78 = vmatpush2.bf16.msra.mxu0 0
  %79 = vmatprep.subr.bf16.mxu0 0
  %80 = vmatpush2.bf16.msra.mxu0 0
  %81 = vmatprep.mubr.bf16.mxu0 0
  %82 = vmatmul.mubr.bf16.gmra.mxu0 %v47
  %v83 = vpop.f32.mrf.mxu0
  %v84 = vadd.f32 %v31, %v83
  %v85 = vpop.f32.mrf.mxu0
  %v86 = vpop.f32.mrf.mxu0
  %v87 = vpop.f32.mrf.mxu0
  %88 = vdwg.mxu0
  %v89 = vtanh.pop %v84
  %v90 = vpack.c.bf16 %v89, %v89
  %v91 = vld [vmem:[%s3] sm:$0xff]
  %v92 = vld [vmem:[%s3 + $0x8] sm:$0xff]
  %v93 = vld [vmem:[%s3 + $0x10] sm:$0xff]
  %v94 = vld [vmem:[%s3 + $0x18] sm:$0xff]
  %v95 = vld [vmem:[%s3 + $0x20] sm:$0xff]
  %v96 = vld [vmem:[%s3 + $0x28] sm:$0xff]
  %v97 = vld [vmem:[%s3 + $0x30] sm:$0xff]
  %v98 = vld [vmem:[%s3 + $0x38] sm:$0xff]
  %v99 = vld [vmem:[%s3 + $0x40] sm:$0xff]
  %v100 = vld [vmem:[%s3 + $0x48] sm:$0xff]
  %v101 = vld [vmem:[%s3 + $0x50] sm:$0xff]
  %v102 = vld [vmem:[%s3 + $0x58] sm:$0xff]
  %v103 = vld [vmem:[%s3 + $0x60] sm:$0xff]
  %v104 = vld [vmem:[%s3 + $0x68] sm:$0xff]
  %v105 = vld [vmem:[%s3 + $0x70] sm:$0xff]
  %v106 = vld [vmem:[%s3 + $0x78] sm:$0xff]
  %v107 = vld [vmem:[%s4] sm:$0x3]
  %v109 = vlaneseq
  %v110 = vshrl.u32 %v109, 7
  %v111 = vsub.s32 0, %v110
  %v112 = vrot.slane %v107, %v111
  %v113 = vlaneseq
  %v114 = vshrl.u32 %v113, 7
  %v115 = vsub.s32 1, %v114
  %v116 = vrot.slane %v107, %v115
  %v135 = vunpack.c.l.b16 %v91
  %v136 = vunpack.c.h.b16 %v91
  %v137 = vunpack.c.l.b16 %v92
  %v138 = vunpack.c.h.b16 %v92
  %v139 = vunpack.c.l.b16 %v93
  %v140 = vunpack.c.h.b16 %v93
  %v141 = vunpack.c.l.b16 %v94
  %v142 = vunpack.c.h.b16 %v94
  %v143 = vunpack.c.l.b16 %v95
  %v144 = vunpack.c.h.b16 %v95
  %v145 = vunpack.c.l.b16 %v96
  %v146 = vunpack.c.h.b16 %v96
  %v147 = vunpack.c.l.b16 %v97
  %v148 = vunpack.c.h.b16 %v97
  %v149 = vunpack.c.l.b16 %v98
  %v150 = vunpack.c.h.b16 %v98
  %v151 = vunpack.c.l.b16 %v99
  %v152 = vunpack.c.h.b16 %v99
  %v153 = vunpack.c.l.b16 %v100
  %v154 = vunpack.c.h.b16 %v100
  %v155 = vunpack.c.l.b16 %v101
  %v156 = vunpack.c.h.b16 %v101
  %v157 = vunpack.c.l.b16 %v102
  %v158 = vunpack.c.h.b16 %v102
  %v159 = vunpack.c.l.b16 %v103
  %v160 = vunpack.c.h.b16 %v103
  %v161 = vunpack.c.l.b16 %v104
  %v162 = vunpack.c.h.b16 %v104
  %v163 = vunpack.c.l.b16 %v105
  %v164 = vunpack.c.h.b16 %v105
  %v165 = vunpack.c.l.b16 %v106
  %v166 = vunpack.c.h.b16 %v106
  %v167 = vpack.c.b16 %v137, %v135
  %v168 = vpack.c.b16 %v138, %v136
  %v169 = vpack.c.b16 %v141, %v139
  %v170 = vpack.c.b16 %v142, %v140
  %v171 = vpack.c.b16 %v145, %v143
  %v172 = vpack.c.b16 %v146, %v144
  %v173 = vpack.c.b16 %v149, %v147
  %v174 = vpack.c.b16 %v150, %v148
  %v175 = vpack.c.b16 %v153, %v151
  %v176 = vpack.c.b16 %v154, %v152
  %v177 = vpack.c.b16 %v157, %v155
  %v178 = vpack.c.b16 %v158, %v156
  %v179 = vpack.c.b16 %v161, %v159
  %v180 = vpack.c.b16 %v162, %v160
  %v181 = vpack.c.b16 %v165, %v163
  %v182 = vpack.c.b16 %v166, %v164
  %199 = vmatprep.subr.bf16.mxu0 %v182
  %200 = vmatpush1.bf16.msra.mxu0 %v181
  %201 = vmatprep.subr.bf16.mxu0 %v180
  %202 = vmatpush1.bf16.msra.mxu0 %v179
  %203 = vmatprep.subr.bf16.mxu0 %v178
  %204 = vmatpush1.bf16.msra.mxu0 %v177
  %205 = vmatprep.subr.bf16.mxu0 %v176
  %206 = vmatpush1.bf16.msra.mxu0 %v175
  %207 = vmatprep.subr.bf16.mxu0 %v174
  %208 = vmatpush1.bf16.msra.mxu0 %v173
  %209 = vmatprep.subr.bf16.mxu0 %v172
  %210 = vmatpush1.bf16.msra.mxu0 %v171
  %211 = vmatprep.subr.bf16.mxu0 %v170
  %212 = vmatpush1.bf16.msra.mxu0 %v169
  %213 = vmatprep.subr.bf16.mxu0 %v168
  %214 = vmatpush1.bf16.msra.mxu0 %v167
  %215 = vmatprep.subr.bf16.mxu0 0
  %216 = vmatpush2.bf16.msra.mxu0 0
  %217 = vmatprep.subr.bf16.mxu0 0
  %218 = vmatpush2.bf16.msra.mxu0 0
  %219 = vmatprep.subr.bf16.mxu0 0
  %220 = vmatpush2.bf16.msra.mxu0 0
  %221 = vmatprep.subr.bf16.mxu0 0
  %222 = vmatpush2.bf16.msra.mxu0 0
  %223 = vmatprep.subr.bf16.mxu0 0
  %224 = vmatpush2.bf16.msra.mxu0 0
  %225 = vmatprep.subr.bf16.mxu0 0
  %226 = vmatpush2.bf16.msra.mxu0 0
  %227 = vmatprep.subr.bf16.mxu0 0
  %228 = vmatpush2.bf16.msra.mxu0 0
  %229 = vmatprep.subr.bf16.mxu0 0
  %230 = vmatpush2.bf16.msra.mxu0 0
  %231 = vmatprep.mubr.bf16.mxu0 0
  %232 = vmatmul.mubr.bf16.gmra.mxu0 %v90
  %v233 = vpop.f32.mrf.mxu0
  %v234 = vadd.f32 %v112, %v233
  %v235 = vpop.f32.mrf.mxu0
  %v236 = vadd.f32 %v116, %v235
  %v237 = vpop.f32.mrf.mxu0
  %v238 = vpop.f32.mrf.mxu0
  %239 = vdwg.mxu0
  %v240 = vlaneseq
  %v241 = vand.u32 %v240, 127
  %v242 = vadd.s32 %v241, 128
  %vm243 = vcmp.ge.s32.totalorder %v241, 132
  %vm244 = vcmp.ge.s32.totalorder %v242, 132
  %vm245 = vcmp.lt.s32.totalorder %v241, 136
  %vm246 = vcmp.lt.s32.totalorder %v242, 136
  %vm247 = vmand %vm243, %vm245
  %vm248 = vmand %vm244, %vm246
  %v249 = vmul.f32 %v234, 1.442695
  %v250 = vpow.pop %v249
  %v251 = vmul.f32 %v236, 1.442695
  %v252 = vpow.pop %v251
  %v253 = vsel %vm247, %v250, %v234
  %v254 = vsel %vm248, %v252, %v236
  %255 = vst [vmem:[%s5] sm:$0xff] %v253
  %256 = vst [vmem:[%s5 + $0x8] sm:$0xff] %v254
  // Predicated region
  $region22: #{gmm_forward.1} parent=0 // pred_check
    _
  $region23: #{gmm_forward.1} parent=0 // pred_check_branch
    %258 = sbr.rel (0) target = $region25
  $region24: #{gmm_forward.1} parent=0 // pred_region
    _
  $region25: #{gmm_forward.1} parent=0 // pred_fallthru
    _
  // Predicated region
  $region26: #{gmm_forward.1} parent=0 // pred_check
    _
  $region27: #{gmm_forward.1} parent=0 // pred_check_branch
    %260 = sbr.rel (0) target = $region29
  $region28: #{gmm_forward.1} parent=0 // pred_region
    _
  $region29: #{gmm_forward.1} parent=0 // pred_fallthru
    _

</llo_original>
